<compile_context>
chip_gen: v5e
topology: v5e:2x2
jax: 0.10.0
libtpu: 0.0.40
codegen_flags: <defaults>
</compile_context>

<pallas_src>
import functools

import jax
import jax.numpy as jnp
from jax import lax
from jax.experimental import pallas as pl
from jax.experimental.pallas import tpu as pltpu

_LANE = 128
_SUBLANE = 8
_VMEM_LIMIT = 48 * 1024 * 1024      # scoped VMEM limit: safe on v5e/v6e/v7x
_X_BUDGET = 32 * 1024 * 1024        # budget for the double-buffered x block


# ------------------------------ tiling helpers ------------------------------

def _round_up(n, m):
    return ((n + m - 1) // m) * m


def _batch_tiling(B, max_tile=128, split_threshold=16):
    """Return (B_tile, B_padded). Balanced tiles (padding <= 7 rows); split into
    >= 2 'parallel' tiles when B >= split_threshold so both v7x TCs get work."""
    if B < split_threshold:
        return B, B                       # tiny batch: one full block (legal)
    n_tiles = max(2, -(-B // max_tile))
    bt = _round_up(-(-B // n_tiles), _SUBLANE)
    return bt, _round_up(B, bt)


def _seq_tiling(S, Bt, D, elem_bytes, target=512, x_budget_bytes=_X_BUDGET):
    """Return (S_tile, S_padded). Tile is a multiple of 8 (16 for 2-byte dtypes),
    capped by `target` and by the double-buffered x-block VMEM budget."""
    mult = _SUBLANE * (2 if elem_bytes < 4 else 1)
    max_st = x_budget_bytes // (2 * max(Bt, 1) * max(D, 1) * elem_bytes)
    max_st = max(mult, (max_st // mult) * mult)
    st = min(target, max_st)
    if S <= st:
        return S, S                       # full sequence: block dim == array dim
    return st, _round_up(S, st)


def _k_tiling(K, target=2048):
    """Return (tk, K_padded) for the FC contraction axis (tk multiple of 128,
    balanced so padding waste stays small)."""
    if K <= target:
        return K, K
    nk = -(-K // target)
    tk = _round_up(-(-K // nk), _LANE)
    return tk, _round_up(K, tk)


def _pad2d(a, rows, cols):
    r, c = a.shape
    if r == rows and c == cols:
        return a
    return jnp.pad(a, ((0, rows - r), (0, cols - c)))


# ------------------------------ Pallas kernels ------------------------------

def _ap_kernel(x_ref, w_ref, b_ref, o_ref, acc_ref):
    """ClassificationHead ('AP'): mean-pool over seq (1/S folded into w) + Linear.
    Grid: (batch_tiles, seq_tiles); seq is the reduction axis."""
    si = pl.program_id(1)

    @pl.when(si == 0)
    def _():
        acc_ref[...] = jnp.zeros_like(acc_ref)

    # Running sum over the sequence axis, accumulated in f32 (bf16 x is upcast
    # first -> works on v5e's f32-only VPU and is more accurate).
    acc_ref[...] += jnp.sum(x_ref[...].astype(jnp.float32), axis=1)   # (Bt, D)

    @pl.when(si == pl.num_programs(1) - 1)
    def _():
        o_ref[...] = (jnp.dot(acc_ref[...], w_ref[...],
                              preferred_element_type=jnp.float32)
                      + b_ref[...]).astype(o_ref.dtype)               # (Bt, Cp)


def _fc_kernel(x_ref, w_ref, b_ref, o_ref):
    """FC_ClassificationHead ('FC'): flattened Linear as a K-reduction matmul.
    Grid: (batch_tiles, K_tiles). Output block is resident across ki, so we
    accumulate directly into it (no scratch)."""
    ki = pl.program_id(1)

    @pl.when(ki == 0)
    def _():
        o_ref[...] = jnp.zeros_like(o_ref) + b_ref[...]   # init with bias

    o_ref[...] += jnp.dot(x_ref[...], w_ref[...],
                          preferred_element_type=jnp.float32)


def _at_kernel(x_ref, wa_ref, wf_ref, bf_ref, o_ref,
               m_ref, l_ref, acc_ref, *, seq_len, seq_tile, need_mask):
    """AttentionClassificationHead ('AT'): lane-dense online softmax over the
    sequence grid axis, attention-weighted pooling, then Linear.
    Grid: (batch_tiles, seq_tiles). The attention bias is omitted: softmax over
    the sequence is invariant to a constant shift."""
    si = pl.program_id(1)

    @pl.when(si == 0)
    def _():
        m_ref[...] = jnp.full_like(m_ref, -jnp.inf)
        l_ref[...] = jnp.zeros_like(l_ref)
        acc_ref[...] = jnp.zeros_like(acc_ref)

    x = x_ref[...].astype(jnp.float32)                     # (Bt, St, D) f32 (v5e VPU/EUP)
    # Lane-dense attention score: (Bt, St) with the sequence on lanes.
    s = jnp.sum(x * wa_ref[...][None, :, :], axis=-1)      # (Bt, St)

    if need_mask:                                          # static python branch
        pos = si * seq_tile + lax.broadcasted_iota(jnp.int32, s.shape, 1)
        s = jnp.where(pos < seq_len, s, -jnp.inf)          # padded rows -> weight 0

    m_old = m_ref[...]                                     # (Bt, 1)
    m_new = jnp.maximum(m_old, jnp.max(s, axis=-1, keepdims=True))
    alpha = jnp.exp(m_old - m_new)                         # (Bt, 1)
    p = jnp.exp(s - m_new)                                 # (Bt, St) lane-dense EUP exp

    l_ref[...] = alpha * l_ref[...] + jnp.sum(p, axis=-1, keepdims=True)
    acc_ref[...] = alpha * acc_ref[...] + jnp.sum(p[:, :, None] * x, axis=1)  # (Bt, D)
    m_ref[...] = m_new

    @pl.when(si == pl.num_programs(1) - 1)
    def _():
        pooled = acc_ref[...] / l_ref[...]                 # exact divide, once per tile
        o_ref[...] = (jnp.dot(pooled, wf_ref[...],
                              preferred_element_type=jnp.float32)
                      + bf_ref[...]).astype(o_ref.dtype)   # (Bt, Cp)


# ------------------------------ params & wrapper ------------------------------

def init_head_params(key, input_dim, num_classes, sequence_length):
    """Deterministic synthetic params; Linear weights stored as (in, out)."""
    ks = jax.random.split(key, 8)
    s = lambda n: 1.0 / jnp.sqrt(jnp.float32(n))
    kfc = input_dim * sequence_length
    return {
        # ClassificationHead.fc : Linear(input_dim, num_classes)
        'ap_w': jax.random.uniform(ks[0], (input_dim, num_classes),
                                   jnp.float32, -s(input_dim), s(input_dim)),
        'ap_b': jax.random.uniform(ks[1], (1, num_classes),
                                   jnp.float32, -s(input_dim), s(input_dim)),
        # FC_ClassificationHead.fc : Linear(input_dim*seq_len, num_classes)
        'fc_w': jax.random.uniform(ks[2], (kfc, num_classes),
                                   jnp.float32, -s(kfc), s(kfc)),
        'fc_b': jax.random.uniform(ks[3], (1, num_classes),
                                   jnp.float32, -s(kfc), s(kfc)),
        # AttentionClassificationHead.attention : Linear(input_dim, 1)
        'at_wa': jax.random.uniform(ks[4], (input_dim, 1),
                                    jnp.float32, -s(input_dim), s(input_dim)),
        'at_ba': jax.random.uniform(ks[5], (1, 1),
                                    jnp.float32, -s(input_dim), s(input_dim)),
        # AttentionClassificationHead.fc : Linear(input_dim, num_classes)
        'at_wf': jax.random.uniform(ks[6], (input_dim, num_classes),
                                    jnp.float32, -s(input_dim), s(input_dim)),
        'at_bf': jax.random.uniform(ks[7], (1, num_classes),
                                    jnp.float32, -s(input_dim), s(input_dim)),
    }


@functools.partial(jax.jit, static_argnames=('head',))
def head_forward(params, x, head='AP'):
    """Pallas implementation of Head.forward. x: (B, S, D) float32 -> (B, C) f32."""
    B, S, D = x.shape
    C = params['ap_w'].shape[1]
    Cp = _round_up(C, _LANE)

    cdt = jnp.bfloat16            # compute dtype for the big HBM streams
    ebytes = 2

    Bt, B_pad = _batch_tiling(B, max_tile=(256 if head == 'FC' else 128))
    xc = x.astype(cdt)
    if B_pad != B:
        xc = jnp.pad(xc, ((0, B_pad - B), (0, 0), (0, 0)))
    nb = B_pad // Bt

    mc = pltpu.CompilerParams(dimension_semantics=("parallel", "arbitrary"),
                              vmem_limit_bytes=_VMEM_LIMIT)

    if head == 'AP':
        St, S_pad = _seq_tiling(S, Bt, D, ebytes)
        if S_pad != S:
            xc = jnp.pad(xc, ((0, 0), (0, S_pad - S), (0, 0)))   # zero rows sum to 0
        ns = S_pad // St
        w = _pad2d(params['ap_w'] * (1.0 / S), D, Cp)            # fold 1/S mean into w
        b = _pad2d(params['ap_b'], 1, Cp)
        out = pl.pallas_call(
            _ap_kernel,
            out_shape=jax.ShapeDtypeStruct((B_pad, Cp), jnp.float32),
            grid_spec=pltpu.PrefetchScalarGridSpec(
                num_scalar_prefetch=0,
                grid=(nb, ns),
                in_specs=[
                    pl.BlockSpec((Bt, St, D), lambda bi, si: (bi, si, 0)),
                    pl.BlockSpec((D, Cp), lambda bi, si: (0, 0)),
                    pl.BlockSpec((1, Cp), lambda bi, si: (0, 0)),
                ],
                out_specs=pl.BlockSpec((Bt, Cp), lambda bi, si: (bi, 0)),
                scratch_shapes=[pltpu.VMEM((Bt, D), jnp.float32)],
            ),
            compiler_params=mc,
            cost_estimate=pl.CostEstimate(
                flops=2 * B_pad * S_pad * D + 2 * B_pad * D * Cp,
                transcendentals=0,
                bytes_accessed=(ebytes * B_pad * S_pad * D
                                + 4 * (D * Cp + Cp) * nb
                                + 4 * B_pad * Cp)),
        )(xc, w, b)
        return out[:B, :C]

    elif head == 'FC':
        K = S * D
        x_flat = xc.reshape(B_pad, K)                            # == x.view(B, -1)
        tk, K_pad = _k_tiling(K)
        if K_pad != K:
            x_flat = jnp.pad(x_flat, ((0, 0), (0, K_pad - K)))
        nk = K_pad // tk
        w = _pad2d(params['fc_w'], K_pad, Cp).astype(cdt)        # big weight stream -> bf16
        b = _pad2d(params['fc_b'], 1, Cp)                        # bias stays f32
        out = pl.pallas_call(
            _fc_kernel,
            out_shape=jax.ShapeDtypeStruct((B_pad, Cp), jnp.float32),
            grid_spec=pltpu.PrefetchScalarGridSpec(
                num_scalar_prefetch=0,
                grid=(nb, nk),
                in_specs=[
                    pl.BlockSpec((Bt, tk), lambda bi, ki: (bi, ki)),
                    pl.BlockSpec((tk, Cp), lambda bi, ki: (ki, 0)),
                    pl.BlockSpec((1, Cp), lambda bi, ki: (0, 0)),
                ],
                out_specs=pl.BlockSpec((Bt, Cp), lambda bi, ki: (bi, 0)),
            ),
            compiler_params=mc,
            cost_estimate=pl.CostEstimate(
                flops=2 * B_pad * K_pad * Cp,
                transcendentals=0,
                bytes_accessed=(ebytes * B_pad * K_pad
                                + ebytes * K_pad * Cp * nb       # weight re-read per batch tile
                                + 4 * Cp * nb + 4 * B_pad * Cp)),
        )(x_flat, w, b)
        return out[:B, :C]

    elif head == 'AT':
        St, S_pad = _seq_tiling(S, Bt, D, ebytes)
        if S_pad != S:
            xc = jnp.pad(xc, ((0, 0), (0, S_pad - S), (0, 0)))
        ns = S_pad // St
        wa = params['at_wa'].reshape(1, D)                       # (D,1) -> (1,D) f32 VPU row
        wf = _pad2d(params['at_wf'], D, Cp)                      # small -> keep f32
        bf = _pad2d(params['at_bf'], 1, Cp)
        kernel = functools.partial(_at_kernel, seq_len=S, seq_tile=St,
                                   need_mask=(S_pad != S))
        out = pl.pallas_call(
            kernel,
            out_shape=jax.ShapeDtypeStruct((B_pad, Cp), jnp.float32),
            grid_spec=pltpu.PrefetchScalarGridSpec(
                num_scalar_prefetch=0,
                grid=(nb, ns),
                in_specs=[
                    pl.BlockSpec((Bt, St, D), lambda bi, si: (bi, si, 0)),
                    pl.BlockSpec((1, D), lambda bi, si: (0, 0)),
                    pl.BlockSpec((D, Cp), lambda bi, si: (0, 0)),
                    pl.BlockSpec((1, Cp), lambda bi, si: (0, 0)),
                ],
                out_specs=pl.BlockSpec((Bt, Cp), lambda bi, si: (bi, 0)),
                scratch_shapes=[pltpu.VMEM((Bt, 1), jnp.float32),   # running max
                                pltpu.VMEM((Bt, 1), jnp.float32),   # running denom
                                pltpu.VMEM((Bt, D), jnp.float32)],  # weighted sum
            ),
            compiler_params=mc,
            cost_estimate=pl.CostEstimate(
                flops=4 * B_pad * S_pad * D + 2 * B_pad * D * Cp,
                transcendentals=B_pad * S_pad,
                bytes_accessed=(ebytes * B_pad * S_pad * D
                                + 4 * (D + D * Cp + Cp) * nb
                                + 4 * B_pad * Cp)),
        )(xc, wa, wf, bf)
        return out[:B, :C]

    else:
        raise NotImplementedError(f'classification head does not support {head}')


# ------------------------------ reference (pure JAX) ------------------------------

def head_reference(params, x, head='AP'):
    B, S, D = x.shape
    if head == 'AP':
        pooled = jnp.mean(x, axis=1)
        return pooled @ params['ap_w'] + params['ap_b']
    if head == 'FC':
        return x.reshape(B, -1) @ params['fc_w'] + params['fc_b']
    if head == 'AT':
        scores = jnp.einsum('bsd,dk->bsk', x, params['at_wa']) + params['at_ba']
        attn = jax.nn.softmax(scores, axis=1)
        pooled = jnp.sum(x * attn, axis=1)
        return pooled @ params['at_wf'] + params['at_bf']
    raise NotImplementedError(head)


if __name__ == "__main__":
    B, S, D, C = 2, 8, 32, 5   # batch, sequence_length, input_dim, num_classes

    key = jax.random.PRNGKey(0)
    kx, kp = jax.random.split(key)
    x = jax.random.normal(kx, (B, S, D), jnp.float32)
    params = init_head_params(kp, input_dim=D, num_classes=C, sequence_length=S)

    # bf16 input/weight rounding vs. the pure-f32 reference dominates the error.
    tol = {'AP': 2e-2, 'FC': 3e-2, 'AT': 3e-2}

    ok = True
    for head in ('AP', 'FC', 'AT'):
        out = jax.block_until_ready(head_forward(params, x, head=head))
        ref = head_reference(params, x, head=head)
        if out.shape != (B, C) or not jnp.allclose(out, ref, atol=tol[head],
                                                   rtol=tol[head]):
            ok = False
            err = (float(jnp.max(jnp.abs(out - ref)))
                   if out.shape == ref.shape else 'shape mismatch')
            print(f"[FAIL] head={head} err={err}")

    if ok:
        print("KERNEL_OK")
</pallas_src>

<mosaic_0001>
module attributes {stable_mosaic.version = 11 : i64} {
  func.func @_ap_kernel(%arg0: i32, %arg1: i32, %arg2: memref<2x8x32xbf16, #tpu.memory_space<vmem>>, %arg3: memref<32x128xf32, #tpu.memory_space<vmem>>, %arg4: memref<1x128xf32, #tpu.memory_space<vmem>>, %arg5: memref<2x128xf32, #tpu.memory_space<vmem>>, %arg6: memref<2x32xf32, #tpu.memory_space<vmem>>) attributes {dimension_semantics = [#tpu.dimension_semantics<parallel>, #tpu.dimension_semantics<arbitrary>], iteration_bounds = array<i64: 1, 1>, scalar_prefetch = 0 : i64, scratch_operands = 1 : i64, tpu.core_type = #tpu.core_type<tc>, window_params = [{transform_indices = @transform_0, window_bounds = array<i64: 2, 8, 32>}, {pipeline_mode = #tpu.pipeline_mode<synchronous>, transform_indices = @transform_1, window_bounds = array<i64: 32, 128>}, {pipeline_mode = #tpu.pipeline_mode<synchronous>, transform_indices = @transform_2, window_bounds = array<i64: 1, 128>}, {transform_indices = @transform_3, window_bounds = array<i64: 2, 128>}]} {
    %c0_i32 = arith.constant 0 : i32
    %0 = arith.cmpi eq, %arg1, %c0_i32 : i32
    %1 = arith.extui %0 : i1 to i32
    %c0_i32_0 = arith.constant 0 : i32
    %2 = arith.cmpi ne, %1, %c0_i32_0 : i32
    scf.if %2 {
      %cst_9 = arith.constant 0.000000e+00 : f32
      %12 = vector.broadcast %cst_9 : f32 to vector<2x32xf32>
      %c0_10 = arith.constant 0 : index
      %c0_11 = arith.constant 0 : index
      %13 = vector.load %arg6[%c0_10, %c0_11] : memref<2x32xf32, #tpu.memory_space<vmem>>, vector<2x32xf32>
      tpu.vector_store %arg6[%c0_10, %c0_11], %12 {strides = array<i32>} : memref<2x32xf32, #tpu.memory_space<vmem>>, vector<2x32xf32>,
    } else {
    }
    %c0 = arith.constant 0 : index
    %c0_1 = arith.constant 0 : index
    %3 = vector.load %arg6[%c0, %c0_1] : memref<2x32xf32, #tpu.memory_space<vmem>>, vector<2x32xf32>
    %c0_2 = arith.constant 0 : index
    %c0_3 = arith.constant 0 : index
    %c0_4 = arith.constant 0 : index
    %4 = vector.load %arg2[%c0_2, %c0_3, %c0_4] : memref<2x8x32xbf16, #tpu.memory_space<vmem>>, vector<2x8x32xbf16>
    %5 = arith.extf %4 : vector<2x8x32xbf16> to vector<2x8x32xf32>
    %cst = arith.constant dense<0.000000e+00> : vector<2x32xf32>
    %6 = vector.multi_reduction <add>, %5, %cst [1] : vector<2x8x32xf32> to vector<2x32xf32>
    %7 = arith.addf %3, %6 : vector<2x32xf32>
    %c0_5 = arith.constant 0 : index
    %c0_6 = arith.constant 0 : index
    %8 = vector.load %arg6[%c0_5, %c0_6] : memref<2x32xf32, #tpu.memory_space<vmem>>, vector<2x32xf32>
    tpu.vector_store %arg6[%c0_5, %c0_6], %7 {strides = array<i32>} : memref<2x32xf32, #tpu.memory_space<vmem>>, vector<2x32xf32>,
    %c0_i32_7 = arith.constant 0 : i32
    %9 = arith.cmpi eq, %arg1, %c0_i32_7 : i32
    %10 = arith.extui %9 : i1 to i32
    %c0_i32_8 = arith.constant 0 : i32
    %11 = arith.cmpi ne, %10, %c0_i32_8 : i32
    scf.if %11 {
      %c0_9 = arith.constant 0 : index
      %c0_10 = arith.constant 0 : index
      %12 = vector.load %arg6[%c0_9, %c0_10] : memref<2x32xf32, #tpu.memory_space<vmem>>, vector<2x32xf32>
      %c0_11 = arith.constant 0 : index
      %c0_12 = arith.constant 0 : index
      %13 = vector.load %arg3[%c0_11, %c0_12] : memref<32x128xf32, #tpu.memory_space<vmem>>, vector<32x128xf32>
      %cst_13 = arith.constant dense<0.000000e+00> : vector<2x128xf32>
      %14 = tpu.matmul %12, %13, %cst_13 {dimension_numbers = #tpu.dot_dimension_numbers<[1], [0], [0], [1], [0, 0, 1, 1], [], []>} : vector<2x32xf32>, vector<32x128xf32>, vector<2x128xf32> -> vector<2x128xf32>
      %c0_14 = arith.constant 0 : index
      %c0_15 = arith.constant 0 : index
      %15 = vector.load %arg4[%c0_14, %c0_15] : memref<1x128xf32, #tpu.memory_space<vmem>>, vector<1x128xf32>
      %16 = vector.broadcast %15 : vector<1x128xf32> to vector<2x128xf32>
      %17 = arith.addf %14, %16 : vector<2x128xf32>
      %c0_16 = arith.constant 0 : index
      %c0_17 = arith.constant 0 : index
      %18 = vector.load %arg5[%c0_16, %c0_17] : memref<2x128xf32, #tpu.memory_space<vmem>>, vector<2x128xf32>
      tpu.vector_store %arg5[%c0_16, %c0_17], %17 {strides = array<i32>} : memref<2x128xf32, #tpu.memory_space<vmem>>, vector<2x128xf32>,
    } else {
    }
    return
  }
  func.func @transform_0(%arg0: i32, %arg1: i32) -> (i32, i32, i32) {
    %c0_i32 = arith.constant 0 : i32
    %c0_i32_0 = arith.constant 0 : i32
    return %arg0, %arg1, %c0_i32 : i32, i32, i32
  }
  func.func @transform_1(%arg0: i32, %arg1: i32) -> (i32, i32) {
    %c0_i32 = arith.constant 0 : i32
    %c0_i32_0 = arith.constant 0 : i32
    %c0_i32_1 = arith.constant 0 : i32
    return %c0_i32, %c0_i32_0 : i32, i32
  }
  func.func @transform_2(%arg0: i32, %arg1: i32) -> (i32, i32) {
    %c0_i32 = arith.constant 0 : i32
    %c0_i32_0 = arith.constant 0 : i32
    %c0_i32_1 = arith.constant 0 : i32
    return %c0_i32, %c0_i32_0 : i32, i32
  }
  func.func @transform_3(%arg0: i32, %arg1: i32) -> (i32, i32) {
    %c0_i32 = arith.constant 0 : i32
    %c0_i32_0 = arith.constant 0 : i32
    return %arg0, %c0_i32 : i32, i32
  }
}

</mosaic_0001>

<llo_original>
// kernel: head_forward.1
$region0: #{head_forward.1}
  #allocation0 [shape = 'u32[]', space=smem, size = 0x4, offset = 0x4, fixed_abs, tag = 'smem constant byte address 0x4 - core index']
  #allocation1 [shape = 'u32[72,128]{1,0:T(1,128)}', space=vmem, size = 0x9000, scoped, tag = 'internal scratch']
  #allocation2 [shape = 'f32[2,32]{1,0:T(2,128)}', space=vmem, size = 0x400, scoped, tag = 'scratch operand']
  %s0 = inlined_call_operand.vmem [shape: bf16[2,8,32], index: 0, kind: input, shape index: {}]
  %s1 = inlined_call_operand.vmem [shape: f32[32,128], index: 1, kind: input, shape index: {}]
  %s2 = inlined_call_operand.vmem [shape: f32[1,128], index: 2, kind: input, shape index: {}]
  %s3 = inlined_call_operand.hbm [shape: f32[2,128], index: 3, kind: output, shape index: {}]
  %s4 = sld [smem:[#allocation0]]
  $region30: #{head_forward.1} parent=0
    _
  %s6 = ssub.s32 1, %s4
  %s7 = scalar_select 0, %s6, %s4
  $region1: #{head_forward.1} parent=0
    #allocation3 [shape = 'u8[1024]{0}', space=vmem, size = 0x400, scoped, tag = 'output window, operand 0, single buffered']
    #allocation4 [shape = 's32[1]{0}', space=sflag, size = 0x4, scoped, tag = 'scoped memory for head_forward.1']
    %8 = vsyncpa [#allocation4], 0
    // Predicated region
    $region2: #{head_forward.1} parent=1 // pred_check
      _
    $region3: #{head_forward.1} parent=1 // pred_check_branch
      %10 = sbr.rel (0) target = $region5
    $region4: #{head_forward.1} parent=1 // pred_region
      _
    $region5: #{head_forward.1} parent=1 // pred_fallthru
      _
    // Predicated region
    $region6: #{head_forward.1} parent=1 // pred_check
      _
    $region7: #{head_forward.1} parent=1 // pred_check_branch
      %12 = sbr.rel (0) target = $region9
    $region8: #{head_forward.1} parent=1 // pred_region
      _
    $region9: #{head_forward.1} parent=1 // pred_fallthru
      _
    // Predicated region
    $region10: #{head_forward.1} parent=1 // pred_check
      _
    $region11: #{head_forward.1} parent=1 // pred_check_branch
      %14 = sbr.rel (0) target = $region13
    $region12: #{head_forward.1} parent=1 // pred_region
      _
    $region13: #{head_forward.1} parent=1 // pred_fallthru
      _
    %p15 = scmp.eq.s32.totalorder 0, 0
    // Predicated region
    $region14: #{head_forward.1} parent=1 // pred_check
      %p16 = pneg %p15
    $region15: #{head_forward.1} parent=1 // pred_check_branch
      %18 = sbr.rel (%p16) target = $region17
    $region16: #{head_forward.1} parent=1 // pred_region
      %vm19 = vcmask 254976
      %20 = vst.msk [vmem:[#allocation2] sm:$0x3] %vm19, 0.0
    $region17: #{head_forward.1} parent=1 // pred_fallthru
      _
    %v21 = vld [vmem:[#allocation2] sm:$0x3]
    %v22 = vld [vmem:[%s0] sm:$0xf]
    %v23 = vld [vmem:[%s0 + $0x4] sm:$0xf]
    %v24 = vunpack.c.l.bf16 %v22
    %v25 = vunpack.c.l.bf16 %v23
    %vm26 = vcmask 261120
    %v27 = vsel %vm26, %v24, 0.0
    %v28 = vrot.slane %v27, 4
    %v29 = vadd.f32 %v27, %v28
    %v30 = vrot.slane %v29, 2
    %v31 = vadd.f32 %v29, %v30
    %v32 = vrot.slane %v31, 1
    %v33 = vadd.f32 %v31, %v32
    %v34 = vsel %vm26, %v25, 0.0
    %v35 = vrot.slane %v34, 4
    %v36 = vadd.f32 %v34, %v35
    %v37 = vrot.slane %v36, 2
    %v38 = vadd.f32 %v36, %v37
    %v39 = vrot.slane %v38, 1
    %v40 = vadd.f32 %v38, %v39
    %vm43 = vcmask 1041409
    %v44 = vsel %vm43, %v40, %v33
    %v46 = vadd.f32 %v21, %v44
    %vm47 = vcmask 254976
    %48 = vst.msk [vmem:[#allocation2] sm:$0x3] %vm47, %v46
    // Predicated region
    $region18: #{head_forward.1} parent=1 // pred_check
      %p49 = pneg %p15
    $region19: #{head_forward.1} parent=1 // pred_check_branch
      %51 = sbr.rel (%p49) target = $region21
    $region20: #{head_forward.1} parent=1 // pred_region
      %v52 = vld [vmem:[#allocation2] sm:$0x3]
      %v53 = vld [vmem:[%s1] sm:$0xff]
      %v54 = vld [vmem:[%s1 + $0x8] sm:$0xff]
      %v55 = vld [vmem:[%s1 + $0x10] sm:$0xff]
      %v56 = vld [vmem:[%s1 + $0x18] sm:$0xff]
      %v57 = vld [vmem:[%s2] sm:$0x1]
      %v59 = vperm.slane %v57, 0
      %v62 = vsel %vm26, %v52, 0
      %64 = vmatpush.msra.mxu0 0.0
      %65 = vmatpush.msra.mxu0 0.0
      %66 = vmatpush.msra.mxu0 0.0
      %67 = vmatpush.msra.mxu0 0.0
      %68 = vmatpush.msra.mxu0 0.0
      %69 = vmatpush.msra.mxu0 0.0
      %70 = vmatpush.msra.mxu0 0.0
      %71 = vmatpush.msra.mxu0 0.0
      %72 = vmatpush.msra.mxu0 0.0
      %73 = vmatpush.msra.mxu0 0.0
      %74 = vmatpush.msra.mxu0 0.0
      %75 = vmatpush.msra.mxu0 0.0
      %76 = vmatpush.msra.mxu0 %v56
      %77 = vmatpush.msra.mxu0 %v55
      %78 = vmatpush.msra.mxu0 %v54
      %79 = vmatpush.msra.mxu0 %v53
      %80 = vmatmul.f32.gmra.mxu0 %v62
      %v81 = vpop.f32.mrf.mxu0
      %v82 = vadd.f32 %v59, %v81
      %83 = vdwg.mxu0
      %84 = vst [vmem:[#allocation3] sm:$0x3] %v82
    $region21: #{head_forward.1} parent=1 // pred_fallthru
      _
    // Predicated region
    $region22: #{head_forward.1} parent=1 // pred_check
      _
    $region23: #{head_forward.1} parent=1 // pred_check_branch
      %86 = sbr.rel (0) target = $region25
    $region24: #{head_forward.1} parent=1 // pred_region
      %88 = vsyncadd [#allocation4], 0
      %s90 = sshll.u32 [#allocation3], 4
      %s91 = int_to_ptr.vmem [resolvable:$true] %s90
      %s92 = sshll.u32 %s3, 4
      %s93 = int_to_ptr.hbm [resolvable:$true] %s92
      %95 = dma.vmem_to_hbm [thread:$0]  %s91, 32, %s93, [#allocation4]
    $region25: #{head_forward.1} parent=1 // pred_fallthru
      _
    // Predicated region
    $region26: #{head_forward.1} parent=1 // pred_check
      _
    $region27: #{head_forward.1} parent=1 // pred_check_branch
      %97 = sbr.rel (0) target = $region29
    $region28: #{head_forward.1} parent=1 // pred_region
      %99 = dma.done [#allocation4], 32
    $region29: #{head_forward.1} parent=1 // pred_fallthru
      _
    %100 = vsyncpa [#allocation4], 1

</llo_original>
